<compile_context>
chip_gen: v7x
topology: tpu7x:2x2x1
jax: 0.10.0
libtpu: 0.0.40
codegen_flags: <defaults>
</compile_context>

<pallas_src>
import math

import jax
import jax.numpy as jnp
from jax.experimental import pallas as pl
from jax.experimental.pallas import tpu as pltpu


def _round_up(x, m):
    return ((x + m - 1) // m) * m


def _patch_embed_kernel(patch_ref, w_ref, pos_ref, out_ref):
    # patch_ref: (tt, K_pad) bf16 | w_ref: (K_pad, te) bf16
    # pos_ref:   (tt, te) bf16 (conv bias + cls token already folded in)
    # out_ref:   (tt, te) out_dtype
    proj = jnp.dot(patch_ref[...], w_ref[...], preferred_element_type=jnp.float32)
    out_ref[...] = (proj + pos_ref[...].astype(jnp.float32)).astype(out_ref.dtype)


def patch_embedding(x_nchw, conv_w, conv_b, cls_token, pos_emb, patch_size,
                    out_dtype=jnp.float32):
    """x_nchw: (B, C, H, W); conv_w: (E, C, p, p); conv_b: (E,);
    cls_token: (1, 1, E); pos_emb: (1, P+1, E)."""
    B, C, H, W = x_nchw.shape
    E = conv_w.shape[0]
    p = patch_size
    Hp, Wp = H // p, W // p
    P = Hp * Wp
    K = C * p * p
    T = P + 1                                     # tokens incl. cls

    E_pad = _round_up(E, 128)                     # lane-dense output stores
    K_pad = _round_up(K, 128)                     # lane-dense LHS / aligned weight rows
    out_bytes = jnp.dtype(out_dtype).itemsize

    # conservative (everything double-buffered) per-step VMEM estimate
    def _est(tt, te):
        return (2 * tt * K_pad * 2          # patch tile (bf16)
                + 2 * K_pad * te * 2        # weight (bf16)
                + 2 * tt * te * 2           # pos (bf16)
                + 2 * tt * te * out_bytes)  # output

    budget = 20 * 1024 * 1024
    if _est(T, E_pad) <= budget:
        tt = T                                    # whole image's tokens in one block
    else:
        tt = 1024
        while tt > 128 and _est(tt, E_pad) > budget:
            tt //= 2
    T_pad = _round_up(T, tt)
    n_tok = T_pad // tt

    # keep >= 2 parallel grid steps (both v7x TensorCores) even at batch 1
    n_e = 2 if (B * n_tok < 2 and E_pad % 256 == 0) else 1
    te = E_pad // n_e

    # --- patch extraction (pure layout; == Conv2d(k=s=p) + Flatten(2) + permute) ----
    patches = x_nchw.reshape(B, C, Hp, p, Wp, p)
    patches = patches.transpose(0, 2, 4, 1, 3, 5).reshape(B, P, K)
    patches = patches.astype(jnp.bfloat16)
    # single pad op: cls slot in front, token tail pad, K pad (all zeros)
    patches_aug = jnp.pad(patches, ((0, 0), (1, T_pad - T), (0, K_pad - K)))

    # --- params ----------------------------------------------------------------------
    w2d = conv_w.reshape(E, K).T.astype(jnp.bfloat16)                      # (K, E)
    w2d = jnp.pad(w2d, ((0, K_pad - K), (0, E_pad - E)))                   # (K_pad, E_pad)

    pos = pos_emb.reshape(T, E).astype(jnp.float32)
    row0 = pos[0:1] + cls_token.reshape(1, E)                # cls row: no conv bias
    rest = pos[1:] + conv_b.astype(jnp.float32)[None, :]     # bias folded into pos
    pos_aug = jnp.concatenate([row0, rest], axis=0)
    pos_aug = jnp.pad(pos_aug, ((0, T_pad - T), (0, E_pad - E)))
    pos_aug = pos_aug.astype(jnp.bfloat16)                   # padded rows stay exactly 0

    # grid-invariant operands get a single buffer to save VMEM
    w_invariant = (n_e == 1)
    pos_invariant = (n_e == 1 and n_tok == 1)

    def _spec(shape, imap, invariant):
        if invariant:
            return pl.BlockSpec(shape, imap, pipeline_mode=pl.Buffered(1))
        return pl.BlockSpec(shape, imap)

    vmem_limit = int(min(max(_est(tt, te) * 3 // 2 + (1 << 20), 4 << 20), 48 << 20))

    out = pl.pallas_call(
        _patch_embed_kernel,
        out_shape=jax.ShapeDtypeStruct((B, T_pad, E_pad), out_dtype),
        grid_spec=pltpu.PrefetchScalarGridSpec(
            num_scalar_prefetch=0,
            grid=(n_tok, B, n_e),               # tokens outermost, embed-split innermost
            in_specs=[
                pl.BlockSpec((None, tt, K_pad), lambda t, b, e: (b, t, 0)),
                _spec((K_pad, te), lambda t, b, e: (0, e), w_invariant),
                _spec((tt, te), lambda t, b, e: (t, e), pos_invariant),
            ],
            out_specs=pl.BlockSpec((None, tt, te), lambda t, b, e: (b, t, e)),
        ),
        compiler_params=pltpu.CompilerParams(
            dimension_semantics=("parallel", "parallel", "parallel"),
            vmem_limit_bytes=vmem_limit),
    )(patches_aug, w2d, pos_aug)

    if T_pad != T or E_pad != E:
        # only needed when E isn't a multiple of 128 or tokens had to be tiled;
        # real ViT dims (E % 128 == 0, whole-T block) skip this copy entirely.
        out = out[:, :T, :E]
    return out


def _reference(x_nchw, conv_w, conv_b, cls_token, pos_emb, patch_size):
    # pure-JAX f32 reference of the PyTorch forward (eval mode)
    y = jax.lax.conv_general_dilated(
        x_nchw.astype(jnp.float32), conv_w.astype(jnp.float32),
        window_strides=(patch_size, patch_size), padding="VALID",
        dimension_numbers=("NCHW", "OIHW", "NCHW"),
    ) + conv_b.reshape(1, -1, 1, 1)
    B, E, Hp, Wp = y.shape
    y = y.reshape(B, E, Hp * Wp).transpose(0, 2, 1)              # (B, P, E)
    cls = jnp.broadcast_to(cls_token, (B, 1, E))
    y = jnp.concatenate([cls, y], axis=1)                         # (B, P+1, E)
    return y + pos_emb


if __name__ == "__main__":
    # small shapes: batch=2, in_channels=4, 16x16 image, patch=4 -> 16 patches, embed_dim=32
    B, C, H, W = 2, 4, 16, 16
    patch_size = 4
    embed_dim = 32
    num_patches = (H // patch_size) * (W // patch_size)

    key = jax.random.PRNGKey(0)
    kx, kw, kb, kc, kp = jax.random.split(key, 5)

    x = jax.random.normal(kx, (B, C, H, W), dtype=jnp.float32)
    fan_in = C * patch_size * patch_size
    bound = 1.0 / math.sqrt(fan_in)
    conv_w = jax.random.uniform(kw, (embed_dim, C, patch_size, patch_size),
                                minval=-bound, maxval=bound, dtype=jnp.float32)
    conv_b = jax.random.uniform(kb, (embed_dim,), minval=-bound, maxval=bound,
                                dtype=jnp.float32)
    cls_token = jax.random.normal(kc, (1, 1, embed_dim), dtype=jnp.float32)
    pos_emb = jax.random.normal(kp, (1, num_patches + 1, embed_dim), dtype=jnp.float32)

    out = patch_embedding(x, conv_w, conv_b, cls_token, pos_emb, patch_size)
    out = jax.block_until_ready(out)

    ref = _reference(x, conv_w, conv_b, cls_token, pos_emb, patch_size)
    assert out.shape == (B, num_patches + 1, embed_dim)
    # bf16 operands / bf16 pos table (f32 accumulation) -> relaxed tolerance vs f32 ref
    assert jnp.allclose(out, ref, atol=3e-2, rtol=3e-2)
    print("KERNEL_OK")
</pallas_src>

<mosaic_0001>
module attributes {stable_mosaic.version = 11 : i64} {
  func.func @_patch_embed_kernel(%arg0: i32, %arg1: i32, %arg2: i32, %arg3: memref<1x17x128xbf16, #tpu.memory_space<vmem>>, %arg4: memref<128x128xbf16, #tpu.memory_space<vmem>>, %arg5: memref<17x128xbf16, #tpu.memory_space<vmem>>, %arg6: memref<1x17x128xf32, #tpu.memory_space<vmem>>) attributes {dimension_semantics = [#tpu.dimension_semantics<parallel>, #tpu.dimension_semantics<parallel>, #tpu.dimension_semantics<parallel>], iteration_bounds = array<i64: 1, 2, 1>, scalar_prefetch = 0 : i64, scratch_operands = 0 : i64, tpu.core_type = #tpu.core_type<tc>, window_params = [{transform_indices = @transform_0, window_bounds = array<i64: 1, 17, 128>}, {pipeline_mode = #tpu.pipeline_mode<synchronous>, transform_indices = @transform_1, window_bounds = array<i64: 128, 128>}, {pipeline_mode = #tpu.pipeline_mode<synchronous>, transform_indices = @transform_2, window_bounds = array<i64: 17, 128>}, {transform_indices = @transform_3, window_bounds = array<i64: 1, 17, 128>}]} {
    %c0 = arith.constant 0 : index
    %c0_0 = arith.constant 0 : index
    %c0_1 = arith.constant 0 : index
    %0 = vector.load %arg3[%c0, %c0_0, %c0_1] : memref<1x17x128xbf16, #tpu.memory_space<vmem>>, vector<1x17x128xbf16>
    %1 = vector.shape_cast %0 : vector<1x17x128xbf16> to vector<17x128xbf16>
    %c0_2 = arith.constant 0 : index
    %c0_3 = arith.constant 0 : index
    %2 = vector.load %arg4[%c0_2, %c0_3] : memref<128x128xbf16, #tpu.memory_space<vmem>>, vector<128x128xbf16>
    %cst = arith.constant dense<0.000000e+00> : vector<17x128xf32>
    %3 = tpu.matmul %1, %2, %cst {dimension_numbers = #tpu.dot_dimension_numbers<[1], [0], [0], [1], [0, 0, 1, 1], [], []>} : vector<17x128xbf16>, vector<128x128xbf16>, vector<17x128xf32> -> vector<17x128xf32>
    %c0_4 = arith.constant 0 : index
    %c0_5 = arith.constant 0 : index
    %4 = vector.load %arg5[%c0_4, %c0_5] : memref<17x128xbf16, #tpu.memory_space<vmem>>, vector<17x128xbf16>
    %5 = arith.extf %4 : vector<17x128xbf16> to vector<17x128xf32>
    %6 = arith.addf %3, %5 : vector<17x128xf32>
    %c0_6 = arith.constant 0 : index
    %c0_7 = arith.constant 0 : index
    %c0_8 = arith.constant 0 : index
    %7 = vector.load %arg6[%c0_6, %c0_7, %c0_8] : memref<1x17x128xf32, #tpu.memory_space<vmem>>, vector<1x17x128xf32>
    %8 = vector.shape_cast %7 : vector<1x17x128xf32> to vector<17x128xf32>
    %9 = vector.shape_cast %6 : vector<17x128xf32> to vector<1x17x128xf32>
    tpu.vector_store %arg6[%c0_6, %c0_7, %c0_8], %9 {strides = array<i32>} : memref<1x17x128xf32, #tpu.memory_space<vmem>>, vector<1x17x128xf32>,
    return
  }
  func.func @transform_0(%arg0: i32, %arg1: i32, %arg2: i32) -> (i32, i32, i32) {
    %c0_i32 = arith.constant 0 : i32
    %c0_i32_0 = arith.constant 0 : i32
    return %arg1, %arg0, %c0_i32 : i32, i32, i32
  }
  func.func @transform_1(%arg0: i32, %arg1: i32, %arg2: i32) -> (i32, i32) {
    %c0_i32 = arith.constant 0 : i32
    %c0_i32_0 = arith.constant 0 : i32
    return %c0_i32, %arg2 : i32, i32
  }
  func.func @transform_2(%arg0: i32, %arg1: i32, %arg2: i32) -> (i32, i32) {
    %c0_i32 = arith.constant 0 : i32
    return %arg0, %arg2 : i32, i32
  }
  func.func @transform_3(%arg0: i32, %arg1: i32, %arg2: i32) -> (i32, i32, i32) {
    %c0_i32 = arith.constant 0 : i32
    return %arg1, %arg0, %arg2 : i32, i32, i32
  }
}

</mosaic_0001>

<llo_original>
// kernel: tpu_custom_call.1
$region0: #{tpu_custom_call.1}
  #allocation0 [shape = 'u32[]', space=smem, size = 0x4, offset = 0x4, fixed_abs, tag = 'smem constant byte address 0x4 - core index']
  #allocation1 [shape = 'u32[144,128]{1,0:T(1,128)}', space=vmem, size = 0x12000, scoped, tag = 'internal scratch']
  %s0 = inlined_call_operand.vmem [shape: bf16[2,17,128], index: 0, kind: input, shape index: {}]
  %s1 = inlined_call_operand.hbm [shape: bf16[128,128], index: 1, kind: input, shape index: {}]
  %s2 = inlined_call_operand.vmem [shape: bf16[17,128], index: 2, kind: input, shape index: {}]
  %s3 = inlined_call_operand.vmem [shape: f32[2,17,128], index: 3, kind: output, shape index: {}]
  %s4 = sld [smem:[#allocation0]]
  $region49: #{tpu_custom_call.1} parent=0
    _
  %s6 = ssub.s32 1, %s4
  %s7 = scalar_select 0, %s6, %s4
  $region1: #{tpu_custom_call.1} parent=0
    #allocation2 [shape = 'u8[32768]{0}', space=vmem, size = 0x8000, scoped, tag = 'input window, operand 1, single buffered']
    #allocation3 [shape = 's32[2]{0}', space=sflag, size = 0x8, scoped, tag = 'scoped memory for tpu_custom_call.1']
    %8 = vsyncpa [#allocation3], 0
    loop: start=0, step=1, limit=4
    $region2: #{tpu_custom_call.1} parent=1 // loop_pre_header
      _
    $region3: #{tpu_custom_call.1} parent=1 // loop_header
      %s10 = sphi 0, %s14
      %p11 = scmp.ge.s32.totalorder %s10, 4
      %s17 = sphi 0, %s36
      %s18 = sphi 0, %s32
      %s19 = sphi 0, %s28
      %s20 = sphi 0, %s17
      %s21 = sphi 0, %s18
      %s22 = sphi 0, %s19
      %s23 = sphi 0, %s20
      %s24 = sphi 0, %s21
      %s25 = sphi 0, %s22
      %s41 = sphi 0, %s43
      %s44 = sphi 0, %s41
      %s45 = sphi 0, %s44
      %s61 = sphi 0, %s45
      %s67 = sphi 0, %s69
      %s70 = sphi 0, %s67
      %s71 = sphi 0, %s70
      %s87 = sphi 0, %s71
      %s95 = sphi 0, %s97
      %s98 = sphi 0, %s95
      %s99 = sphi 0, %s98
      %s115 = sphi 0, %s99
      %s125 = sphi 0, %s127
      %s128 = sphi 0, %s125
      %s129 = sphi 0, %s128
      %s145 = sphi 0, %s129
    $region4: #{tpu_custom_call.1} parent=1 // loop_header_branch
      %13 = sbr.rel (%p11) target = $region8
    $region5: #{tpu_custom_call.1} parent=1 // loop_body
      %s15 = ssub.s32 %s10, 1
      %s16 = ssub.s32 %s10, 2
      %s26 = sadd.s32 1, %s19
      %p27 = scmp.ge.s32.totalorder %s26, 1
      %s28 = scalar_select %p27, 0, %s26
      %s29 = sadd.s32 1, %s18
      %s30 = scalar_select %p27, %s29, %s18
      %p31 = scmp.ge.s32.totalorder %s30, 2
      %s32 = scalar_select %p31, 0, %s30
      %s33 = sadd.s32 1, %s17
      %s34 = scalar_select %p31, %s33, %s17
      %p35 = scmp.ge.s32.totalorder %s34, 1
      %s36 = scalar_select %p35, 0, %s34
      %s37 = ssub.s32 %s18, %s32
      %s38 = ssub.s32 %s17, %s36
      %s39 = sor.u32 %s37, %s38
      %p40 = scmp.eq.s32.totalorder %s39, 0
      %s42 = sadd.s32 %s41, 1
      %s43 = scalar_select %p40, %s41, %s42
      %p46 = pneg %p40
      %p47 = scmp.eq.s32.totalorder %s10, 1
      %p48 = por %p46, %p47
      %p49 = scmp.ne.s32.totalorder %s41, %s44
      %p50 = scmp.eq.s32.totalorder %s10, 0
      %p51 = por %p49, %p50
      %p52 = scmp.ne.s32.totalorder %s41, %s44
      %p53 = scmp.eq.s32.totalorder %s15, 1
      %p54 = por %p52, %p53
      %p55 = scmp.ne.s32.totalorder %s44, %s45
      %p56 = scmp.eq.s32.totalorder %s15, 0
      %p57 = por %p55, %p56
      %p58 = scmp.ne.s32.totalorder %s44, %s45
      %p59 = scmp.eq.s32.totalorder %s16, 1
      %p60 = por %p58, %p59
      %p62 = scmp.ne.s32.totalorder %s45, %s61
      %p63 = scmp.eq.s32.totalorder %s16, 0
      %p64 = por %p62, %p63
      %s65 = ssub.s32 %s19, %s28
      %p66 = scmp.eq.s32.totalorder %s65, 0
      %s68 = sadd.s32 %s67, 1
      %s69 = scalar_select %p66, %s67, %s68
      %p72 = pneg %p66
      %p73 = scmp.eq.s32.totalorder %s10, 1
      %p74 = por %p72, %p73
      %p75 = scmp.ne.s32.totalorder %s67, %s70
      %p76 = scmp.eq.s32.totalorder %s10, 0
      %p77 = por %p75, %p76
      %p78 = scmp.ne.s32.totalorder %s67, %s70
      %p79 = scmp.eq.s32.totalorder %s15, 1
      %p80 = por %p78, %p79
      %p81 = scmp.ne.s32.totalorder %s70, %s71
      %p82 = scmp.eq.s32.totalorder %s15, 0
      %p83 = por %p81, %p82
      %p84 = scmp.ne.s32.totalorder %s70, %s71
      %p85 = scmp.eq.s32.totalorder %s16, 1
      %p86 = por %p84, %p85
      %p88 = scmp.ne.s32.totalorder %s71, %s87
      %p89 = scmp.eq.s32.totalorder %s16, 0
      %p90 = por %p88, %p89
      %s91 = ssub.s32 %s17, %s36
      %s92 = ssub.s32 %s19, %s28
      %s93 = sor.u32 %s91, %s92
      %p94 = scmp.eq.s32.totalorder %s93, 0
      %s96 = sadd.s32 %s95, 1
      %s97 = scalar_select %p94, %s95, %s96
      %p100 = pneg %p94
      %p101 = scmp.eq.s32.totalorder %s10, 1
      %p102 = por %p100, %p101
      %p103 = scmp.ne.s32.totalorder %s95, %s98
      %p104 = scmp.eq.s32.totalorder %s10, 0
      %p105 = por %p103, %p104
      %p106 = scmp.ne.s32.totalorder %s95, %s98
      %p107 = scmp.eq.s32.totalorder %s15, 1
      %p108 = por %p106, %p107
      %p109 = scmp.ne.s32.totalorder %s98, %s99
      %p110 = scmp.eq.s32.totalorder %s15, 0
      %p111 = por %p109, %p110
      %p112 = scmp.ne.s32.totalorder %s98, %s99
      %p113 = scmp.eq.s32.totalorder %s16, 1
      %p114 = por %p112, %p113
      %p116 = scmp.ne.s32.totalorder %s99, %s115
      %p117 = scmp.eq.s32.totalorder %s16, 0
      %p118 = por %p116, %p117
      %s119 = ssub.s32 %s18, %s32
      %s120 = ssub.s32 %s17, %s36
      %s121 = sor.u32 %s119, %s120
      %s122 = ssub.s32 %s19, %s28
      %s123 = sor.u32 %s121, %s122
      %p124 = scmp.eq.s32.totalorder %s123, 0
      %s126 = sadd.s32 %s125, 1
      %s127 = scalar_select %p124, %s125, %s126
      %p130 = pneg %p124
      %p131 = scmp.eq.s32.totalorder %s10, 1
      %p132 = por %p130, %p131
      %p133 = scmp.ne.s32.totalorder %s125, %s128
      %p134 = scmp.eq.s32.totalorder %s10, 0
      %p135 = por %p133, %p134
      %p136 = scmp.ne.s32.totalorder %s125, %s128
      %p137 = scmp.eq.s32.totalorder %s15, 1
      %p138 = por %p136, %p137
      %p139 = scmp.ne.s32.totalorder %s128, %s129
      %p140 = scmp.eq.s32.totalorder %s15, 0
      %p141 = por %p139, %p140
      %p142 = scmp.ne.s32.totalorder %s128, %s129
      %p143 = scmp.eq.s32.totalorder %s16, 1
      %p144 = por %p142, %p143
      %p146 = scmp.ne.s32.totalorder %s129, %s145
      %p147 = scmp.eq.s32.totalorder %s16, 0
      %p148 = por %p146, %p147
      %p149 = scmp.le.s32.totalorder 1, %s10
      %p150 = scmp.lt.s32.totalorder %s10, 3
      %p151 = pnand %p149, %p150
      %p152 = pneg %p151
      // Predicated region
      $region9: #{tpu_custom_call.1} parent=5 // pred_check
        _
      $region10: #{tpu_custom_call.1} parent=5 // pred_check_branch
        %154 = sbr.rel (%p151) target = $region12
      $region11: #{tpu_custom_call.1} parent=5 // pred_region
        %s155 = ssub.s32 %s10, 1
        // Predicated region
        $region13: #{tpu_custom_call.1} parent=11 // pred_check
          %p156 = pneg %p83
        $region14: #{tpu_custom_call.1} parent=11 // pred_check_branch
          %158 = sbr.rel (%p156) target = $region16
        $region15: #{tpu_custom_call.1} parent=11 // pred_region
          %s160 = ssub.s32 1024, 1024
          %161 = vsyncadd [#allocation3], %s160
          %s162 = smul.addr %s22, 64
          %s163 = scalar_lea.hbm %s1, %s162
          %s164 = sshll.u32 [#allocation2], 4
          %s165 = int_to_ptr.vmem [resolvable:$true] %s164
          %170 = dma.hbm_to_vmem [thread:$0]  %s163, 1024, %s165, [#allocation3], 64, 64, 4
        $region16: #{tpu_custom_call.1} parent=11 // pred_fallthru
          _
        // Predicated region
        $region17: #{tpu_custom_call.1} parent=11 // pred_check
          %p171 = pneg %p111
        $region18: #{tpu_custom_call.1} parent=11 // pred_check_branch
          %173 = sbr.rel (%p171) target = $region20
        $region19: #{tpu_custom_call.1} parent=11 // pred_region
          %s174 = smul.u32 3, %s20
          %p175 = scmp.lt.s32.totalorder %s174, 2
          %s176 = scalar_select %p175, %s174, 2
          %p177 = scmp.lt.s32.totalorder %s22, 0
          %s178 = scalar_select %p177, %s22, 0
          %s179 = sadd.s32 %s178, %s176
          %s180 = smul.addr %s179, 4
          %s181 = scalar_lea.vmem %s2, %s180
          %s182 = smul.u32 3, %s20
        $region20: #{tpu_custom_call.1} parent=11 // pred_fallthru
          _
      $region12: #{tpu_custom_call.1} parent=5 // pred_fallthru
        _
      %p183 = scmp.lt.s32.totalorder %s10, 2
      // Predicated region
      $region21: #{tpu_custom_call.1} parent=5 // pred_check
        %p184 = pneg %p183
      $region22: #{tpu_custom_call.1} parent=5 // pred_check_branch
        %186 = sbr.rel (%p184) target = $region24
      $region23: #{tpu_custom_call.1} parent=5 // pred_region
        // Predicated region
        $region25: #{tpu_custom_call.1} parent=23 // pred_check
          %p187 = pneg %p51
        $region26: #{tpu_custom_call.1} parent=23 // pred_check_branch
          %189 = sbr.rel (%p187) target = $region28
        $region27: #{tpu_custom_call.1} parent=23 // pred_region
          %s190 = smul.u32 3, %s17
          %p191 = scmp.lt.s32.totalorder %s18, 1
          %s192 = scalar_select %p191, %s18, 1
          %p193 = scmp.lt.s32.totalorder %s190, 2
          %s194 = scalar_select %p193, %s190, 2
          %s195 = smul.addr %s192, 3
          %s196 = sadd.s32 %s194, %s195
          %s197 = smul.addr %s196, 4
          %s198 = scalar_lea.vmem %s0, %s197
          %s199 = smul.u32 3, %s17
        $region28: #{tpu_custom_call.1} parent=23 // pred_fallthru
          _
      $region24: #{tpu_custom_call.1} parent=5 // pred_fallthru
        _
      %p200 = scmp.le.s32.totalorder 1, %s10
      %p201 = scmp.lt.s32.totalorder %s10, 3
      %p202 = pnand %p200, %p201
      %p203 = pneg %p202
      // Predicated region
      $region29: #{tpu_custom_call.1} parent=5 // pred_check
        _
      $region30: #{tpu_custom_call.1} parent=5 // pred_check_branch
        %205 = sbr.rel (%p202) target = $region32
      $region31: #{tpu_custom_call.1} parent=5 // pred_region
        %s206 = ssub.s32 %s10, 1
        // Predicated region
        $region33: #{tpu_custom_call.1} parent=31 // pred_check
          %p207 = pneg %p83
        $region34: #{tpu_custom_call.1} parent=31 // pred_check_branch
          %209 = sbr.rel (%p207) target = $region36
        $region35: #{tpu_custom_call.1} parent=31 // pred_region
          %210 = dma.done [#allocation3], 1024
        $region36: #{tpu_custom_call.1} parent=31 // pred_fallthru
          _
        %s211 = smul.u32 3, %s20
        %p212 = scmp.lt.s32.totalorder %s21, 1
        %s213 = scalar_select %p212, %s21, 1
        %p214 = scmp.lt.s32.totalorder %s211, 2
        %s215 = scalar_select %p214, %s211, 2
        %s216 = smul.addr %s213, 3
        %s217 = sadd.s32 %s215, %s216
        %s218 = smul.addr %s217, 4
        %s219 = scalar_lea.vmem %s0, %s218
        %p220 = pneg %p57
        %p221 = pneg %p54
        %p222 = pneg %p83
        %p223 = pneg %p80
        %s224 = smul.u32 3, %s20
        %p225 = scmp.lt.s32.totalorder %s224, 2
        %s226 = scalar_select %p225, %s224, 2
        %p227 = scmp.lt.s32.totalorder %s22, 0
        %s228 = scalar_select %p227, %s22, 0
        %s229 = sadd.s32 %s228, %s226
        %s230 = smul.addr %s229, 4
        %s231 = scalar_lea.vmem %s2, %s230
        %p232 = pneg %p111
        %p233 = pneg %p108
        %p234 = pneg %p141
        %p235 = pneg %p138
        %s236 = smul.u32 3, %s20
        %p237 = scmp.lt.s32.totalorder %s21, 1
        %s238 = scalar_select %p237, %s21, 1
        %p239 = scmp.lt.s32.totalorder %s236, 2
        %s240 = scalar_select %p239, %s236, 2
        %p241 = scmp.lt.s32.totalorder %s22, 0
        %s242 = scalar_select %p241, %s22, 0
        %s243 = sadd.s32 %s242, %s240
        %s244 = smul.addr %s238, 3
        %s245 = sadd.s32 %s243, %s244
        %s246 = smul.addr %s245, 8
        %s247 = scalar_lea.vmem %s3, %s246
        %s248 = smul.u32 3, %s20
        %p249 = scmp.lt.s32.totalorder %s21, 1
        %s250 = scalar_select %p249, %s21, 1
        %p251 = scmp.lt.s32.totalorder %s248, 2
        %s252 = scalar_select %p251, %s248, 2
        %s253 = smul.addr %s250, 3
        %s254 = sadd.s32 %s252, %s253
        %s255 = smul.addr %s254, 4
        %s256 = scalar_lea.vmem %s0, %s255
        %s257 = smul.u32 3, %s20
        %s258 = smul.u32 3, %s20
        %p259 = scmp.lt.s32.totalorder %s258, 2
        %s260 = scalar_select %p259, %s258, 2
        %p261 = scmp.lt.s32.totalorder %s22, 0
        %s262 = scalar_select %p261, %s22, 0
        %s263 = sadd.s32 %s262, %s260
        %s264 = smul.addr %s263, 4
        %s265 = scalar_lea.vmem %s2, %s264
        %s266 = smul.u32 3, %s20
        %s267 = smul.u32 3, %s20
        %p268 = scmp.lt.s32.totalorder %s21, 1
        %s269 = scalar_select %p268, %s21, 1
        %p270 = scmp.lt.s32.totalorder %s267, 2
        %s271 = scalar_select %p270, %s267, 2
        %p272 = scmp.lt.s32.totalorder %s22, 0
        %s273 = scalar_select %p272, %s22, 0
        %s274 = sadd.s32 %s273, %s271
        %s275 = smul.addr %s269, 3
        %s276 = sadd.s32 %s274, %s275
        %s277 = smul.addr %s276, 8
        %s278 = scalar_lea.vmem %s3, %s277
        %s279 = smul.u32 3, %s20
        %v281 = vld [vmem:[%s256] sm:$0xf]
        %v282 = vld [vmem:[%s256 + $0x4] sm:$0xf]
        %v283 = vld [vmem:[%s256 + $0x8] sm:$0x1]
        %v284 = vld [vmem:[#allocation2] sm:$0xf]
        %v285 = vld [vmem:[#allocation2 + $0x4] sm:$0xf]
        %v286 = vld [vmem:[#allocation2 + $0x8] sm:$0xf]
        %v287 = vld [vmem:[#allocation2 + $0xc] sm:$0xf]
        %v288 = vld [vmem:[#allocation2 + $0x10] sm:$0xf]
        %v289 = vld [vmem:[#allocation2 + $0x14] sm:$0xf]
        %v290 = vld [vmem:[#allocation2 + $0x18] sm:$0xf]
        %v291 = vld [vmem:[#allocation2 + $0x1c] sm:$0xf]
        %v292 = vld [vmem:[#allocation2 + $0x20] sm:$0xf]
        %v293 = vld [vmem:[#allocation2 + $0x24] sm:$0xf]
        %v294 = vld [vmem:[#allocation2 + $0x28] sm:$0xf]
        %v295 = vld [vmem:[#allocation2 + $0x2c] sm:$0xf]
        %v296 = vld [vmem:[#allocation2 + $0x30] sm:$0xf]
        %v297 = vld [vmem:[#allocation2 + $0x34] sm:$0xf]
        %v298 = vld [vmem:[#allocation2 + $0x38] sm:$0xf]
        %v299 = vld [vmem:[#allocation2 + $0x3c] sm:$0xf]
        %v300 = vld [vmem:[%s265] sm:$0xf]
        %v301 = vld [vmem:[%s265 + $0x4] sm:$0xf]
        %v302 = vld [vmem:[%s265 + $0x8] sm:$0x1]
        %v303 = vunpack.c.l.bf16 %v300
        %v304 = vunpack.c.l.bf16 %v301
        %v305 = vunpack.c.l.bf16 %v302
        %v309 = vunpack.c.l.b16 %v281
        %v310 = vunpack.c.l.b16 %v282
        %v311 = vunpack.c.l.b16 %v283
        %v312 = vpack.c.b16 %v310, %v309
        %v313 = vpack.c.b16 %v311, %v311
        %v332 = vunpack.c.l.b16 %v284
        %v333 = vunpack.c.l.b16 %v285
        %v334 = vunpack.c.l.b16 %v286
        %v335 = vunpack.c.l.b16 %v287
        %v336 = vunpack.c.l.b16 %v288
        %v337 = vunpack.c.l.b16 %v289
        %v338 = vunpack.c.l.b16 %v290
        %v339 = vunpack.c.l.b16 %v291
        %v340 = vunpack.c.l.b16 %v292
        %v341 = vunpack.c.l.b16 %v293
        %v342 = vunpack.c.l.b16 %v294
        %v343 = vunpack.c.l.b16 %v295
        %v344 = vunpack.c.l.b16 %v296
        %v345 = vunpack.c.l.b16 %v297
        %v346 = vunpack.c.l.b16 %v298
        %v347 = vunpack.c.l.b16 %v299
        %v348 = vpack.c.b16 %v333, %v332
        %v349 = vpack.c.b16 %v335, %v334
        %v350 = vpack.c.b16 %v337, %v336
        %v351 = vpack.c.b16 %v339, %v338
        %v352 = vpack.c.b16 %v341, %v340
        %v353 = vpack.c.b16 %v343, %v342
        %v354 = vpack.c.b16 %v345, %v344
        %v355 = vpack.c.b16 %v347, %v346
        %364 = vmatprep.subr.bf16.mxu0 0
        %365 = vmatpush1.bf16.msra.mxu0 %v348
        %366 = vmatprep.subr.bf16.mxu0 0
        %367 = vmatpush1.bf16.msra.mxu0 %v349
        %368 = vmatprep.subr.bf16.mxu0 0
        %369 = vmatpush1.bf16.msra.mxu0 %v350
        %370 = vmatprep.subr.bf16.mxu0 0
        %371 = vmatpush1.bf16.msra.mxu0 %v351
        %372 = vmatprep.subr.bf16.mxu0 0
        %373 = vmatpush1.bf16.msra.mxu0 %v352
        %374 = vmatprep.subr.bf16.mxu0 0
        %375 = vmatpush1.bf16.msra.mxu0 %v353
        %376 = vmatprep.subr.bf16.mxu0 0
        %377 = vmatpush1.bf16.msra.mxu0 %v354
        %378 = vmatprep.subr.bf16.mxu0 0
        %379 = vmatpush1.bf16.msra.mxu0 %v355
        %380 = vmatprep.subr.bf16.mxu0 0
        %381 = vmatpush1.bf16.msra.mxu0 0
        %382 = vmatprep.subr.bf16.mxu0 0
        %383 = vmatpush1.bf16.msra.mxu0 0
        %384 = vmatprep.subr.bf16.mxu0 0
        %385 = vmatpush1.bf16.msra.mxu0 0
        %386 = vmatprep.subr.bf16.mxu0 0
        %387 = vmatpush1.bf16.msra.mxu0 0
        %388 = vmatprep.subr.bf16.mxu0 0
        %389 = vmatpush1.bf16.msra.mxu0 0
        %390 = vmatprep.subr.bf16.mxu0 0
        %391 = vmatpush1.bf16.msra.mxu0 0
        %392 = vmatprep.subr.bf16.mxu0 0
        %393 = vmatpush1.bf16.msra.mxu0 0
        %394 = vmatprep.subr.bf16.mxu0 0
        %395 = vmatpush1.bf16.msra.mxu0 0
        %396 = vmatprep.mubr.bf16.mxu0 0
        %397 = vmatmul.mubr.bf16.gmra.mrb[0].mxu0 %v312
        %v398 = vpop.f32.mrb[0].mxu0
        %v399 = vadd.f32 %v303, %v398
        %v400 = vpop.f32.mrb[0].mxu0
        %v401 = vpop.f32.mrb[0].mxu0
        %v402 = vadd.f32 %v304, %v401
        %v403 = vpop.f32.mrb[0].mxu0
        %404 = vmatprep.mubr.bf16.mxu0 0
        %405 = vmatmul.mubr.bf16.gmra.mrb[0].mxu0 %v313
        %v406 = vpop.f32.mrb[0].mxu0
        %v407 = vadd.f32 %v305, %v406
        %v408 = vpop.f32.mrb[0].mxu0
        %v409 = vpop.f32.mrb[0].mxu0
        %v410 = vpop.f32.mrb[0].mxu0
        %411 = vdwg.mxu0
        %412 = vst [vmem:[%s278] sm:$0xff] %v399
        %413 = vst [vmem:[%s278 + $0x8] sm:$0xff] %v402
        %414 = vst [vmem:[%s278 + $0x10] sm:$0x1] %v407
        %s415 = smul.u32 3, %s20
        %p416 = scmp.lt.s32.totalorder %s21, 1
        %s417 = scalar_select %p416, %s21, 1
        %p418 = scmp.lt.s32.totalorder %s415, 2
        %s419 = scalar_select %p418, %s415, 2
        %p420 = scmp.lt.s32.totalorder %s22, 0
        %s421 = scalar_select %p420, %s22, 0
        %s422 = sadd.s32 %s421, %s419
        %s423 = smul.addr %s417, 3
        %s424 = sadd.s32 %s422, %s423
        %s425 = smul.addr %s424, 8
        %s426 = scalar_lea.vmem %s3, %s425
        // Predicated region
        $region37: #{tpu_custom_call.1} parent=31 // pred_check
          %p427 = pneg %p138
        $region38: #{tpu_custom_call.1} parent=31 // pred_check_branch
          %429 = sbr.rel (%p427) target = $region40
        $region39: #{tpu_custom_call.1} parent=31 // pred_region
          %s430 = smul.u32 3, %s20
        $region40: #{tpu_custom_call.1} parent=31 // pred_fallthru
          _
      $region32: #{tpu_custom_call.1} parent=5 // pred_fallthru
        _
      %p431 = scmp.le.s32.totalorder 2, %s10
      // Predicated region
      $region41: #{tpu_custom_call.1} parent=5 // pred_check
        %p432 = pneg %p431
      $region42: #{tpu_custom_call.1} parent=5 // pred_check_branch
        %434 = sbr.rel (%p432) target = $region44
      $region43: #{tpu_custom_call.1} parent=5 // pred_region
        %s435 = ssub.s32 %s10, 2
        // Predicated region
        $region45: #{tpu_custom_call.1} parent=43 // pred_check
          %p436 = pneg %p144
        $region46: #{tpu_custom_call.1} parent=43 // pred_check_branch
          %438 = sbr.rel (%p436) target = $region48
        $region47: #{tpu_custom_call.1} parent=43 // pred_region
          %s439 = smul.u32 3, %s23
          %p440 = scmp.lt.s32.totalorder %s24, 1
          %s441 = scalar_select %p440, %s24, 1
          %p442 = scmp.lt.s32.totalorder %s439, 2
          %s443 = scalar_select %p442, %s439, 2
          %p444 = scmp.lt.s32.totalorder %s25, 0
          %s445 = scalar_select %p444, %s25, 0
          %s446 = sadd.s32 %s445, %s443
          %s447 = smul.addr %s441, 3
          %s448 = sadd.s32 %s446, %s447
          %s449 = smul.addr %s448, 8
          %s450 = scalar_lea.vmem %s3, %s449
        $region48: #{tpu_custom_call.1} parent=43 // pred_fallthru
          _
      $region44: #{tpu_custom_call.1} parent=5 // pred_fallthru
        _
    $region6: #{tpu_custom_call.1} parent=1 // loop_footer
      %s14 = sadd.s32 1, %s10
    $region7: #{tpu_custom_call.1} parent=1 // loop_footer_branch
      %9 = sbr.rel target = $region3
    $region8: #{tpu_custom_call.1} parent=1 // loop_exit
      _
    %451 = vsyncpa [#allocation3], 1
    %s452 = scalar_lea.sflag [#allocation3], 1
    %453 = vsyncpa %s452, 1

</llo_original>
